<compile_context>
chip_gen: v7x
topology: tpu7x:2x2x1
jax: 0.10.0
libtpu: 0.0.40
codegen_flags: <defaults>
</compile_context>

<pallas_src>
import jax
import jax.numpy as jnp
from jax.experimental import pallas as pl
from jax.experimental.pallas import tpu as pltpu

BN_EPS = 1e-5
PARAM_PAD_ROWS = 8  # extra rows appended to the weight slab (gamma, beta, pad)


def mynet3_kernel(x_ref, wp_ref, o_ref):
    """x_ref: [N, F]; wp_ref: [F + 8, C] (rows 0..F-1 = W^T, F = gamma, F+1 = beta)."""
    f = x_ref.shape[1]

    x = x_ref[...]                                             # [N, F]  f32
    w = wp_ref[0:f, :]                                         # [F, C]  f32
    gamma = wp_ref[f:f + 1, :]                                 # [1, C]
    beta = wp_ref[f + 1:f + 2, :]                              # [1, C]

    # Linear (bias omitted: cancelled exactly by the training-mode BatchNorm
    # batch-mean subtraction below).
    y = jnp.dot(x, w, preferred_element_type=jnp.float32)      # [N, C]

    # BatchNorm1d, training mode, centered two-pass statistics over axis 0
    # (biased variance, matches PyTorch's normalization path).
    n = y.shape[0]
    inv_n = 1.0 / n
    mean = jnp.sum(y, axis=0, keepdims=True) * inv_n           # [1, C]
    yc = y - mean                                              # [N, C]
    var = jnp.sum(yc * yc, axis=0, keepdims=True) * inv_n      # [1, C]

    # Fold gamma into the inverse std on a [1, C] vreg, then one mul + one add
    # + one max on the [N, C] tile.
    a = gamma * jax.lax.rsqrt(var + BN_EPS)                    # [1, C]
    o_ref[...] = jnp.maximum(yc * a + beta, 0.0)               # ReLU


def pack_params(w, gamma, beta):
    """One-time (init-time) packing of Linear/BN parameters into a single slab.

    w: [C, F] (PyTorch nn.Linear layout); gamma/beta: [C].
    Returns a [F + 8, C] f32 slab: rows 0..F-1 = W^T, row F = gamma,
    row F+1 = beta, remaining rows zero padding (8-row alignment).
    """
    c, f = w.shape
    slab = jnp.zeros((f + PARAM_PAD_ROWS, c), jnp.float32)
    slab = slab.at[:f, :].set(w.T.astype(jnp.float32))
    slab = slab.at[f, :].set(gamma.astype(jnp.float32))
    slab = slab.at[f + 1, :].set(beta.astype(jnp.float32))
    return slab


@jax.jit
def mynet3_forward(x, wp):
    """x: [N, F] f32; wp: [F + 8, C] packed parameter slab from pack_params."""
    n, f = x.shape
    c = wp.shape[1]

    flops = 2 * n * f * c + 8 * n * c
    bytes_accessed = 4 * (n * f + wp.shape[0] * c + n * c)

    return pl.pallas_call(
        mynet3_kernel,
        out_shape=jax.ShapeDtypeStruct((n, c), jnp.float32),
        in_specs=[
            pl.BlockSpec(memory_space=pltpu.MemorySpace.VMEM),
            pl.BlockSpec(memory_space=pltpu.MemorySpace.VMEM),
        ],
        out_specs=pl.BlockSpec(memory_space=pltpu.MemorySpace.VMEM),
        cost_estimate=pl.CostEstimate(
            flops=flops, transcendentals=c, bytes_accessed=bytes_accessed),
    )(x, wp)


def mynet3_reference(x, w, b, gamma, beta):
    # Full PyTorch-equivalent reference (bias included, two-pass statistics).
    y = x @ w.T + b
    mean = jnp.mean(y, axis=0, keepdims=True)
    var = jnp.mean((y - mean) ** 2, axis=0, keepdims=True)
    z = (y - mean) * jax.lax.rsqrt(var + BN_EPS) * gamma + beta
    return jnp.maximum(z, 0.0)


if __name__ == "__main__":
    # Duplicate-key Sequential: surviving module is Linear(64, out) -> BN1d(64)
    # -> ReLU, so the input width must be 64 and out_classes must be 64.
    in_features = 64
    out_classes = 64
    batch = 8

    key = jax.random.PRNGKey(0)
    kx, kw, kb = jax.random.split(key, 3)

    x = jax.random.normal(kx, (batch, in_features), dtype=jnp.float32)

    # nn.Linear(64, out_classes)-style init: U(-1/sqrt(64), 1/sqrt(64))
    bound = 1.0 / (64 ** 0.5)
    w = jax.random.uniform(kw, (out_classes, 64),
                           minval=-bound, maxval=bound, dtype=jnp.float32)
    b = jax.random.uniform(kb, (out_classes,),
                           minval=-bound, maxval=bound, dtype=jnp.float32)

    # BatchNorm1d default affine params.
    gamma = jnp.ones((out_classes,), dtype=jnp.float32)
    beta = jnp.zeros((out_classes,), dtype=jnp.float32)

    # One-time parameter packing ("model init"); the per-call path below is a
    # single jitted pallas_call.
    wp = jax.block_until_ready(pack_params(w, gamma, beta))

    out = jax.block_until_ready(mynet3_forward(x, wp))
    ref = mynet3_reference(x, w, b, gamma, beta)

    assert out.shape == (batch, out_classes)
    assert jnp.allclose(out, ref, atol=1e-4, rtol=1e-4), "mismatch vs JAX reference"

    print("KERNEL_OK")
</pallas_src>

<mosaic_0001>
module attributes {stable_mosaic.version = 11 : i64} {
  func.func @mynet3_kernel(%arg0: memref<8x64xf32, #tpu.memory_space<vmem>>, %arg1: memref<72x64xf32, #tpu.memory_space<vmem>>, %arg2: memref<8x64xf32, #tpu.memory_space<vmem>>) attributes {dimension_semantics = [], scalar_prefetch = 0 : i64, scratch_operands = 0 : i64, tpu.core_type = #tpu.core_type<tc>} {
    %c0 = arith.constant 0 : index
    %c0_0 = arith.constant 0 : index
    %0 = vector.load %arg0[%c0, %c0_0] : memref<8x64xf32, #tpu.memory_space<vmem>>, vector<8x64xf32>
    %c0_1 = arith.constant 0 : index
    %c0_2 = arith.constant 0 : index
    %1 = vector.load %arg1[%c0_1, %c0_2] : memref<72x64xf32, #tpu.memory_space<vmem>>, vector<64x64xf32>
    %c64 = arith.constant 64 : index
    %c0_3 = arith.constant 0 : index
    %2 = vector.load %arg1[%c64, %c0_3] : memref<72x64xf32, #tpu.memory_space<vmem>>, vector<1x64xf32>
    %c65 = arith.constant 65 : index
    %c0_4 = arith.constant 0 : index
    %3 = vector.load %arg1[%c65, %c0_4] : memref<72x64xf32, #tpu.memory_space<vmem>>, vector<1x64xf32>
    %cst = arith.constant dense<0.000000e+00> : vector<8x64xf32>
    %4 = tpu.matmul %0, %1, %cst {dimension_numbers = #tpu.dot_dimension_numbers<[1], [0], [0], [1], [0, 0, 1, 1], [], []>} : vector<8x64xf32>, vector<64x64xf32>, vector<8x64xf32> -> vector<8x64xf32>
    %cst_5 = arith.constant dense<0.000000e+00> : vector<64xf32>
    %5 = vector.multi_reduction <add>, %4, %cst_5 [0] : vector<8x64xf32> to vector<64xf32>
    %6 = vector.shape_cast %5 : vector<64xf32> to vector<1x64xf32>
    %cst_6 = arith.constant 1.250000e-01 : f32
    %7 = vector.broadcast %cst_6 : f32 to vector<1x64xf32>
    %8 = arith.mulf %6, %7 : vector<1x64xf32>
    %9 = vector.broadcast %8 : vector<1x64xf32> to vector<8x64xf32>
    %10 = arith.subf %4, %9 : vector<8x64xf32>
    %11 = arith.mulf %10, %10 : vector<8x64xf32>
    %cst_7 = arith.constant dense<0.000000e+00> : vector<64xf32>
    %12 = vector.multi_reduction <add>, %11, %cst_7 [0] : vector<8x64xf32> to vector<64xf32>
    %13 = vector.shape_cast %12 : vector<64xf32> to vector<1x64xf32>
    %cst_8 = arith.constant 1.250000e-01 : f32
    %14 = vector.broadcast %cst_8 : f32 to vector<1x64xf32>
    %15 = arith.mulf %13, %14 : vector<1x64xf32>
    %cst_9 = arith.constant 9.99999974E-6 : f32
    %16 = vector.broadcast %cst_9 : f32 to vector<1x64xf32>
    %17 = arith.addf %15, %16 : vector<1x64xf32>
    %18 = math.rsqrt %17 : vector<1x64xf32>
    %19 = arith.mulf %2, %18 : vector<1x64xf32>
    %20 = vector.broadcast %19 : vector<1x64xf32> to vector<8x64xf32>
    %21 = arith.mulf %10, %20 : vector<8x64xf32>
    %22 = vector.broadcast %3 : vector<1x64xf32> to vector<8x64xf32>
    %23 = arith.addf %21, %22 : vector<8x64xf32>
    %cst_10 = arith.constant 0.000000e+00 : f32
    %24 = vector.broadcast %cst_10 : f32 to vector<8x64xf32>
    %25 = arith.maximumf %23, %24 : vector<8x64xf32>
    %c0_11 = arith.constant 0 : index
    %c0_12 = arith.constant 0 : index
    %26 = vector.load %arg2[%c0_11, %c0_12] : memref<8x64xf32, #tpu.memory_space<vmem>>, vector<8x64xf32>
    tpu.vector_store %arg2[%c0_11, %c0_12], %25 {strides = array<i32>} : memref<8x64xf32, #tpu.memory_space<vmem>>, vector<8x64xf32>,
    return
  }
}

</mosaic_0001>

<llo_original>
// kernel: mynet3_forward.1
$region0: #{mynet3_forward.1}
  #allocation0 [shape = 'u32[]', space=smem, size = 0x4, offset = 0x4, fixed_abs, tag = 'smem constant byte address 0x4 - core index']
  #allocation1 [shape = 'u32[144,128]{1,0:T(1,128)}', space=vmem, size = 0x12000, scoped, tag = 'internal scratch']
  %s0 = inlined_call_operand.vmem [shape: f32[8,64], index: 0, kind: input, shape index: {}]
  %s1 = inlined_call_operand.vmem [shape: f32[72,64], index: 1, kind: input, shape index: {}]
  %s2 = inlined_call_operand.hbm [shape: f32[8,64], index: 2, kind: output, shape index: {}]
  %s3 = sld [smem:[#allocation0]]
  $region18: #{mynet3_forward.1} parent=0
    _
  %s5 = ssub.s32 1, %s3
  %s6 = scalar_select 0, %s5, %s3
  $region1: #{mynet3_forward.1} parent=0
    #allocation2 [shape = 'u8[4096]{0}', space=vmem, size = 0x1000, scoped, tag = 'output window, operand 0, single buffered']
    #allocation3 [shape = 's32[1]{0}', space=sflag, size = 0x4, scoped, tag = 'scoped memory for mynet3_forward.1']
    %7 = vsyncpa [#allocation3], 0
    // Predicated region
    $region2: #{mynet3_forward.1} parent=1 // pred_check
      _
    $region3: #{mynet3_forward.1} parent=1 // pred_check_branch
      %9 = sbr.rel (0) target = $region5
    $region4: #{mynet3_forward.1} parent=1 // pred_region
      _
    $region5: #{mynet3_forward.1} parent=1 // pred_fallthru
      _
    // Predicated region
    $region6: #{mynet3_forward.1} parent=1 // pred_check
      _
    $region7: #{mynet3_forward.1} parent=1 // pred_check_branch
      %11 = sbr.rel (0) target = $region9
    $region8: #{mynet3_forward.1} parent=1 // pred_region
      _
    $region9: #{mynet3_forward.1} parent=1 // pred_fallthru
      _
    %v12 = vld [vmem:[%s0] sm:$0xff]
    %v13 = vld [vmem:[%s1] sm:$0xff]
    %v14 = vld [vmem:[%s1 + $0x8] sm:$0xff]
    %v15 = vld [vmem:[%s1 + $0x10] sm:$0xff]
    %v16 = vld [vmem:[%s1 + $0x18] sm:$0xff]
    %v17 = vld [vmem:[%s1 + $0x20] sm:$0xff]
    %v18 = vld [vmem:[%s1 + $0x28] sm:$0xff]
    %v19 = vld [vmem:[%s1 + $0x30] sm:$0xff]
    %v20 = vld [vmem:[%s1 + $0x38] sm:$0xff]
    %v21 = vld [vmem:[%s1 + $0x40] sm:$0x1]
    %v22 = vld [vmem:[%s1 + $0x41] sm:$0x1]
    %vm23 = vcmask 523264
    %v25 = vsel %vm23, %v12, 0
    %27 = vmatprep.subr.mxu0 0.0
    %28 = vmatpush1.msra.mxu0 %v13
    %29 = vmatprep.subr.mxu0 0.0
    %30 = vmatpush1.msra.mxu0 %v14
    %31 = vmatprep.subr.mxu0 0.0
    %32 = vmatpush1.msra.mxu0 %v15
    %33 = vmatprep.subr.mxu0 0.0
    %34 = vmatpush1.msra.mxu0 %v16
    %35 = vmatprep.subr.mxu0 0.0
    %36 = vmatpush1.msra.mxu0 %v17
    %37 = vmatprep.subr.mxu0 0.0
    %38 = vmatpush1.msra.mxu0 %v18
    %39 = vmatprep.subr.mxu0 0.0
    %40 = vmatpush1.msra.mxu0 %v19
    %41 = vmatprep.subr.mxu0 0.0
    %42 = vmatpush1.msra.mxu0 %v20
    %43 = vmatprep.subr.mxu0 0.0
    %44 = vmatpush1.msra.mxu0 0.0
    %45 = vmatprep.subr.mxu0 0.0
    %46 = vmatpush1.msra.mxu0 0.0
    %47 = vmatprep.subr.mxu0 0.0
    %48 = vmatpush1.msra.mxu0 0.0
    %49 = vmatprep.subr.mxu0 0.0
    %50 = vmatpush1.msra.mxu0 0.0
    %51 = vmatprep.subr.mxu0 0.0
    %52 = vmatpush1.msra.mxu0 0.0
    %53 = vmatprep.subr.mxu0 0.0
    %54 = vmatpush1.msra.mxu0 0.0
    %55 = vmatprep.subr.mxu0 0.0
    %56 = vmatpush1.msra.mxu0 0.0
    %57 = vmatprep.subr.mxu0 0.0
    %58 = vmatpush1.msra.mxu0 0.0
    %59 = vmatprep.subr.mxu0 0.0
    %60 = vmatpush1.msra.mxu0 0.0
    %61 = vmatprep.subr.mxu0 0.0
    %62 = vmatpush1.msra.mxu0 0.0
    %63 = vmatprep.subr.mxu0 0.0
    %64 = vmatpush1.msra.mxu0 0.0
    %65 = vmatprep.subr.mxu0 0.0
    %66 = vmatpush1.msra.mxu0 0.0
    %67 = vmatprep.subr.mxu0 0.0
    %68 = vmatpush1.msra.mxu0 0.0
    %69 = vmatprep.subr.mxu0 0.0
    %70 = vmatpush1.msra.mxu0 0.0
    %71 = vmatprep.subr.mxu0 0.0
    %72 = vmatpush1.msra.mxu0 0.0
    %73 = vmatprep.subr.mxu0 0.0
    %74 = vmatpush1.msra.mxu0 0.0
    %75 = vmatprep.subr.mxu0 0.0
    %76 = vmatpush1.msra.mxu0 0.0
    %77 = vmatprep.subr.mxu0 0.0
    %78 = vmatpush1.msra.mxu0 0.0
    %79 = vmatprep.subr.mxu0 0.0
    %80 = vmatpush1.msra.mxu0 0.0
    %81 = vmatprep.subr.mxu0 0.0
    %82 = vmatpush1.msra.mxu0 0.0
    %83 = vmatprep.subr.mxu0 0.0
    %84 = vmatpush1.msra.mxu0 0.0
    %85 = vmatprep.subr.mxu0 0.0
    %86 = vmatpush1.msra.mxu0 0.0
    %87 = vmatprep.subr.mxu0 0.0
    %88 = vmatpush1.msra.mxu0 0.0
    %89 = vmatprep.subr.mxu0 0.0
    %90 = vmatpush1.msra.mxu0 0.0
    %91 = vmatprep.mubr.f32.mxu0 0.0
    %92 = vmatmul.mubr.f32.gmra.mrb[0].mxu0 %v25
    %v93 = vpop.f32.mrb[0].mxu0
    %v94 = vadd.f32 0.0, %v93
    %v95 = vpop.f32.mrb[0].mxu0
    %96 = vdwg.mxu0
    %v97 = vsel %vm23, %v94, 0.0
    %v98 = vrot.slane %v97, 4
    %v99 = vadd.f32 %v97, %v98
    %v100 = vrot.slane %v99, 2
    %v101 = vadd.f32 %v99, %v100
    %v102 = vrot.slane %v101, 1
    %v103 = vadd.f32 %v101, %v102
    %v104 = vmul.f32 %v103, 0.125
    %v105 = vsub.f32 %v94, %v104
    %v106 = vmul.f32 %v105, %v105
    %v107 = vsel %vm23, %v106, 0.0
    %v108 = vrot.slane %v107, 4
    %v109 = vadd.f32 %v107, %v108
    %v110 = vrot.slane %v109, 2
    %v111 = vadd.f32 %v109, %v110
    %v112 = vrot.slane %v111, 1
    %v113 = vadd.f32 %v111, %v112
    %v114 = vmul.f32 %v113, 0.125
    %v115 = vadd.f32 %v114, 1e-05
    %v116 = vrsqrt.pop %v115
    %v117 = vmul.f32 %v21, %v116
    %v118 = vlaneseq
    %v119 = vshrl.u32 %v118, 7
    %v120 = vsub.s32 0, %v119
    %v121 = vrot.slane %v117, %v120
    %v122 = vmul.f32 %v105, %v121
    %v123 = vlaneseq
    %v124 = vshrl.u32 %v123, 7
    %v125 = vsub.s32 0, %v124
    %v126 = vrot.slane %v22, %v125
    %v127 = vadd.f32 %v122, %v126
    %v128 = vmax.f32 %v127, 0.0
    %129 = vst.msk [vmem:[#allocation2] sm:$0xff] %vm23, %v128
    // Predicated region
    $region10: #{mynet3_forward.1} parent=1 // pred_check
      _
    $region11: #{mynet3_forward.1} parent=1 // pred_check_branch
      %131 = sbr.rel (0) target = $region13
    $region12: #{mynet3_forward.1} parent=1 // pred_region
      %s133 = ssub.s32 128, 128
      %134 = vsyncadd [#allocation3], %s133
      %s136 = sshll.u32 [#allocation2], 4
      %s137 = int_to_ptr.vmem [resolvable:$true] %s136
      %139 = dma.vmem_to_hbm [thread:$0]  %s137, 128, %s2, [#allocation3]
    $region13: #{mynet3_forward.1} parent=1 // pred_fallthru
      _
    // Predicated region
    $region14: #{mynet3_forward.1} parent=1 // pred_check
      _
    $region15: #{mynet3_forward.1} parent=1 // pred_check_branch
      %141 = sbr.rel (0) target = $region17
    $region16: #{mynet3_forward.1} parent=1 // pred_region
      %142 = dma.done [#allocation3], 128
    $region17: #{mynet3_forward.1} parent=1 // pred_fallthru
      _
    %143 = vsyncpa [#allocation3], 1

</llo_original>
